<compile_context>
chip_gen: v7x
topology: tpu7x:2x2x1
jax: 0.10.0
libtpu: 0.0.40
codegen_flags: <defaults>
</compile_context>

<pallas_src>
import functools

import jax
import jax.numpy as jnp
from jax.experimental import pallas as pl
from jax.experimental.pallas import tpu as pltpu

SCALING_FACTOR = 1.8  # stands in for args.scaling_factor (deterministic constant)


def _round_up(a, b):
    return (a + b - 1) // b * b


def _linear_norm_kernel(x_ref, wcat_ref, bcat_ref, h_ref, *, cout):
    """Stage 1: H = x @ [W1|W2] + [b1|b2]; L2-normalize + scale second half."""
    # MXU matmul, f32 accumulation; bias add in f32.
    h = jnp.dot(x_ref[...], wcat_ref[...], preferred_element_type=jnp.float32)
    h = h + bcat_ref[...]                                    # (tk, 2*Cout) f32

    # Mask selecting the linear2 half of the lanes (avoids sub-128 lane slicing).
    col = jax.lax.broadcasted_iota(jnp.int32, h.shape, 1)
    second = col >= cout

    # F.normalize(p=2, dim=1): x / max(||x||, 1e-12)  ==  x * rsqrt(max(sumsq, 1e-24))
    sumsq = jnp.sum(jnp.where(second, h * h, 0.0), axis=1, keepdims=True)
    inv = jax.lax.rsqrt(jnp.maximum(sumsq, 1e-24)) * SCALING_FACTOR  # EUP, scale folded in
    h_ref[...] = (h * jnp.where(second, inv, 1.0)).astype(h_ref.dtype)


def _spmm_kernel(adj_ref, h_ref, out_ref, acc_ref):
    """Stage 2: out = A_hat @ H, K-tiled with a resident f32 accumulator."""
    @pl.when(pl.program_id(1) == 0)
    def _():
        acc_ref[...] = jnp.zeros_like(acc_ref)

    acc_ref[...] += jnp.dot(adj_ref[...], h_ref[...],
                            preferred_element_type=jnp.float32)

    @pl.when(pl.program_id(1) == pl.num_programs(1) - 1)
    def _():
        out_ref[...] = acc_ref[...].astype(out_ref.dtype)


def encoder_forward(x, w1, b1, w2, b2, adj, *, use_bf16=True, tm=512, tk=512):
    """Full Encoder forward via two pallas_calls.

    x:   (N, Cin) node features
    w1:  (Cin, Cout) linear1 weight (already transposed), b1: (1, Cout)
    w2:  (Cin, Cout) linear2 weight (already transposed), b2: (1, Cout)
    adj: (N, N) gcn-normalized adjacency with self loops
    returns (x_propagated_scaled, mu)  -- matches PyTorch's `return (x, x_)`
    """
    N, Cin = x.shape
    Cout = w1.shape[1]
    C2 = 2 * Cout
    cdt = jnp.bfloat16 if use_bf16 else jnp.float32
    isz = 2 if use_bf16 else 4

    # Fuse the two linear branches (one matmul, one adjacency pass).
    wcat = jnp.concatenate([w1, w2], axis=1).astype(cdt)            # (Cin, 2*Cout)
    bcat = jnp.concatenate([b1, b2], axis=1).astype(jnp.float32)    # (1,   2*Cout)

    # Tile sizes: rows sublane-aligned (8), adjacency K tiles lane-aligned (128).
    tm = min(tm, _round_up(N, 8))
    tk = min(tk, _round_up(N, 128))
    Nm = _round_up(N, tm)       # padded output-row extent
    Nk = _round_up(N, tk)       # padded contraction extent (== H rows)

    # Zero-pad (zero adj rows/cols keep padded nodes inert); cast MXU operands.
    xp = jnp.zeros((Nk, Cin), cdt).at[:N].set(x.astype(cdt))
    adjp = jnp.zeros((Nm, Nk), cdt).at[:N, :N].set(adj.astype(cdt))

    # ---- Stage 1: H = [x@W1+b1 | scale * l2norm(x@W2+b2)], tiled over rows ----
    h = pl.pallas_call(
        functools.partial(_linear_norm_kernel, cout=Cout),
        out_shape=jax.ShapeDtypeStruct((Nk, C2), cdt),
        grid=(Nk // tk,),
        in_specs=[
            pl.BlockSpec((tk, Cin), lambda i: (i, 0)),
            pl.BlockSpec((Cin, C2), lambda i: (0, 0)),
            pl.BlockSpec((1, C2), lambda i: (0, 0)),
        ],
        out_specs=pl.BlockSpec((tk, C2), lambda i: (i, 0)),
        compiler_params=pltpu.CompilerParams(
            dimension_semantics=("parallel",)),
        cost_estimate=pl.CostEstimate(
            flops=2 * Nk * Cin * C2,
            transcendentals=Nk,
            bytes_accessed=(Nk * Cin + Cin * C2 + Nk * C2) * isz),
    )(xp, wcat, bcat)

    # ---- Stage 2: out = A_hat @ H, tiled (M, K) grid with f32 accumulator ----
    out = pl.pallas_call(
        _spmm_kernel,
        out_shape=jax.ShapeDtypeStruct((Nm, C2), jnp.float32),
        grid_spec=pltpu.PrefetchScalarGridSpec(
            num_scalar_prefetch=0,
            grid=(Nm // tm, Nk // tk),
            in_specs=[
                pl.BlockSpec((tm, tk), lambda i, k: (i, k)),   # adjacency tile
                pl.BlockSpec((tk, C2), lambda i, k: (k, 0)),   # H K-slab
            ],
            out_specs=pl.BlockSpec((tm, C2), lambda i, k: (i, 0)),
            scratch_shapes=[pltpu.VMEM((tm, C2), jnp.float32)],
        ),
        compiler_params=pltpu.CompilerParams(
            dimension_semantics=("parallel", "arbitrary"),
            # Tiles are sized well under every generation's scoped-VMEM default;
            # raise this (and the tile sizes) on v6e if the DMA stream is exposed.
            vmem_limit_bytes=48 * 1024 * 1024,
        ),
        cost_estimate=pl.CostEstimate(
            flops=2 * Nm * Nk * C2,
            transcendentals=0,
            bytes_accessed=(Nm * Nk + Nk * C2) * isz + Nm * C2 * 4),
    )(adjp, h)

    out = out[:N]
    mu = out[:, :Cout]        # propagated linear1 branch  -> "x_"
    x_out = out[:, Cout:]     # normalized/scaled/propagated linear2 branch -> "x"
    return x_out, mu


def build_normalized_adj(edge_index, num_nodes):
    """Dense A_hat = D^-1/2 (A + I) D^-1/2 from (2, E) edge_index (glue, not kernel)."""
    src, dst = edge_index[0], edge_index[1]
    a = jnp.zeros((num_nodes, num_nodes), jnp.float32)
    a = a.at[src, dst].set(1.0)
    a = jnp.maximum(a, a.T)                                   # symmetrize
    a = a + jnp.eye(num_nodes, dtype=jnp.float32)             # self loops
    deg = jnp.sum(a, axis=1)
    d_inv_sqrt = jnp.where(deg > 0, 1.0 / jnp.sqrt(deg), 0.0)
    return a * d_inv_sqrt[:, None] * d_inv_sqrt[None, :]


if __name__ == "__main__":
    key = jax.random.PRNGKey(0)
    k_x, k_e, k_w1, k_b1, k_w2, k_b2 = jax.random.split(key, 6)

    N = 256
    in_channels = 32
    out_channels = 16

    # Deterministic node features.
    x = jax.random.normal(k_x, (N, in_channels), dtype=jnp.float32)

    # Deterministic edge_index: a ring plus extra random edges.
    ring_src = jnp.arange(N, dtype=jnp.int32)
    ring_dst = (ring_src + 1) % N
    extra = jax.random.randint(k_e, (2, 64), 0, N, dtype=jnp.int32)
    edge_index = jnp.concatenate([jnp.stack([ring_src, ring_dst]), extra], axis=1)

    adj = build_normalized_adj(edge_index, N)

    # Deterministic Linear params (PyTorch-style uniform init), stored as (in, out).
    bound = 1.0 / jnp.sqrt(jnp.float32(in_channels))
    w1 = jax.random.uniform(k_w1, (in_channels, out_channels), jnp.float32, -bound, bound)
    b1 = jax.random.uniform(k_b1, (1, out_channels), jnp.float32, -bound, bound)
    w2 = jax.random.uniform(k_w2, (in_channels, out_channels), jnp.float32, -bound, bound)
    b2 = jax.random.uniform(k_b2, (1, out_channels), jnp.float32, -bound, bound)

    # Pure-JAX f32 reference of the same math.
    h1_ref = adj @ (x @ w1 + b1)
    h2 = x @ w2 + b2
    h2n = h2 / jnp.maximum(jnp.linalg.norm(h2, axis=1, keepdims=True), 1e-12)
    x_ref = adj @ (h2n * SCALING_FACTOR)

    # f32 kernel path (tight check). Small tiles -> (2, 2) grid so the
    # K-accumulation and pl.when init/finalize paths are actually exercised.
    x_out32, mu_out32 = encoder_forward(x, w1, b1, w2, b2, adj,
                                        use_bf16=False, tm=128, tk=128)
    jax.block_until_ready((x_out32, mu_out32))
    assert x_out32.shape == (N, out_channels) and mu_out32.shape == (N, out_channels)
    assert jnp.allclose(mu_out32, h1_ref, atol=1e-4), \
        float(jnp.max(jnp.abs(mu_out32 - h1_ref)))
    assert jnp.allclose(x_out32, x_ref, atol=1e-4), \
        float(jnp.max(jnp.abs(x_out32 - x_ref)))

    # Default bf16-MXU path (f32 accumulation) -- looser tolerance vs f32 reference.
    x_out, mu_out = encoder_forward(x, w1, b1, w2, b2, adj,
                                    use_bf16=True, tm=128, tk=128)
    jax.block_until_ready((x_out, mu_out))
    assert jnp.allclose(mu_out, h1_ref, atol=5e-2), \
        float(jnp.max(jnp.abs(mu_out - h1_ref)))
    assert jnp.allclose(x_out, x_ref, atol=5e-2), \
        float(jnp.max(jnp.abs(x_out - x_ref)))

    print("KERNEL_OK")
</pallas_src>

<mosaic_0001>
module attributes {stable_mosaic.version = 11 : i64} {
  func.func @_linear_norm_kernel(%arg0: i32, %arg1: memref<128x32xf32, #tpu.memory_space<vmem>>, %arg2: memref<32x32xf32, #tpu.memory_space<vmem>>, %arg3: memref<1x32xf32, #tpu.memory_space<vmem>>, %arg4: memref<128x32xf32, #tpu.memory_space<vmem>>) attributes {dimension_semantics = [#tpu.dimension_semantics<parallel>], iteration_bounds = array<i64: 2>, scalar_prefetch = 0 : i64, scratch_operands = 0 : i64, tpu.core_type = #tpu.core_type<tc>, window_params = [{transform_indices = @transform_0, window_bounds = array<i64: 128, 32>}, {pipeline_mode = #tpu.pipeline_mode<synchronous>, transform_indices = @transform_1, window_bounds = array<i64: 32, 32>}, {pipeline_mode = #tpu.pipeline_mode<synchronous>, transform_indices = @transform_2, window_bounds = array<i64: 1, 32>}, {transform_indices = @transform_3, window_bounds = array<i64: 128, 32>}]} {
    %c0 = arith.constant 0 : index
    %c0_0 = arith.constant 0 : index
    %0 = vector.load %arg1[%c0, %c0_0] : memref<128x32xf32, #tpu.memory_space<vmem>>, vector<128x32xf32>
    %c0_1 = arith.constant 0 : index
    %c0_2 = arith.constant 0 : index
    %1 = vector.load %arg2[%c0_1, %c0_2] : memref<32x32xf32, #tpu.memory_space<vmem>>, vector<32x32xf32>
    %cst = arith.constant dense<0.000000e+00> : vector<128x32xf32>
    %2 = tpu.matmul %0, %1, %cst {dimension_numbers = #tpu.dot_dimension_numbers<[1], [0], [0], [1], [0, 0, 1, 1], [], []>} : vector<128x32xf32>, vector<32x32xf32>, vector<128x32xf32> -> vector<128x32xf32>
    %c0_3 = arith.constant 0 : index
    %c0_4 = arith.constant 0 : index
    %3 = vector.load %arg3[%c0_3, %c0_4] : memref<1x32xf32, #tpu.memory_space<vmem>>, vector<1x32xf32>
    %4 = vector.broadcast %3 : vector<1x32xf32> to vector<128x32xf32>
    %5 = arith.addf %2, %4 : vector<128x32xf32>
    %6 = tpu.iota {dimensions = array<i32: 1>} : vector<128x32xi32>
    %c16_i32 = arith.constant 16 : i32
    %7 = vector.broadcast %c16_i32 : i32 to vector<128x32xi32>
    %8 = arith.cmpi sge, %6, %7 : vector<128x32xi32>
    %9 = arith.mulf %5, %5 : vector<128x32xf32>
    %cst_5 = arith.constant 0.000000e+00 : f32
    %10 = vector.broadcast %cst_5 : f32 to vector<128x32xf32>
    %11 = arith.select %8, %9, %10 : vector<128x32xi1>, vector<128x32xf32>
    %cst_6 = arith.constant dense<0.000000e+00> : vector<128xf32>
    %12 = vector.multi_reduction <add>, %11, %cst_6 [1] : vector<128x32xf32> to vector<128xf32>
    %13 = vector.shape_cast %12 : vector<128xf32> to vector<128x1xf32>
    %cst_7 = arith.constant 1.000000e-24 : f32
    %14 = vector.broadcast %cst_7 : f32 to vector<128x1xf32>
    %15 = arith.maximumf %13, %14 : vector<128x1xf32>
    %16 = math.rsqrt %15 : vector<128x1xf32>
    %cst_8 = arith.constant 1.800000e+00 : f32
    %17 = vector.broadcast %cst_8 : f32 to vector<128x1xf32>
    %18 = arith.mulf %16, %17 : vector<128x1xf32>
    %cst_9 = arith.constant 1.000000e+00 : f32
    %19 = vector.shape_cast %18 : vector<128x1xf32> to vector<128x1xf32>
    %20 = vector.broadcast %19 : vector<128x1xf32> to vector<128x32xf32>
    %21 = vector.broadcast %cst_9 : f32 to vector<128x32xf32>
    %22 = arith.select %8, %20, %21 : vector<128x32xi1>, vector<128x32xf32>
    %23 = arith.mulf %5, %22 : vector<128x32xf32>
    %c0_10 = arith.constant 0 : index
    %c0_11 = arith.constant 0 : index
    %24 = vector.load %arg4[%c0_10, %c0_11] : memref<128x32xf32, #tpu.memory_space<vmem>>, vector<128x32xf32>
    tpu.vector_store %arg4[%c0_10, %c0_11], %23 {strides = array<i32>} : memref<128x32xf32, #tpu.memory_space<vmem>>, vector<128x32xf32>,
    return
  }
  func.func @transform_0(%arg0: i32) -> (i32, i32) {
    %c0_i32 = arith.constant 0 : i32
    %c0_i32_0 = arith.constant 0 : i32
    return %arg0, %c0_i32 : i32, i32
  }
  func.func @transform_1(%arg0: i32) -> (i32, i32) {
    %c0_i32 = arith.constant 0 : i32
    %c0_i32_0 = arith.constant 0 : i32
    %c0_i32_1 = arith.constant 0 : i32
    return %c0_i32, %c0_i32_0 : i32, i32
  }
  func.func @transform_2(%arg0: i32) -> (i32, i32) {
    %c0_i32 = arith.constant 0 : i32
    %c0_i32_0 = arith.constant 0 : i32
    %c0_i32_1 = arith.constant 0 : i32
    return %c0_i32, %c0_i32_0 : i32, i32
  }
  func.func @transform_3(%arg0: i32) -> (i32, i32) {
    %c0_i32 = arith.constant 0 : i32
    %c0_i32_0 = arith.constant 0 : i32
    return %arg0, %c0_i32 : i32, i32
  }
}

</mosaic_0001>

<llo_original>
// kernel: tpu_custom_call.1
$region0: #{tpu_custom_call.1}
  #allocation0 [shape = 'u32[]', space=smem, size = 0x4, offset = 0x4, fixed_abs, tag = 'smem constant byte address 0x4 - core index']
  #allocation1 [shape = 'u32[144,128]{1,0:T(1,128)}', space=vmem, size = 0x12000, scoped, tag = 'internal scratch']
  %s0 = inlined_call_operand.vmem [shape: f32[256,32], index: 0, kind: input, shape index: {}]
  %s1 = inlined_call_operand.vmem [shape: f32[32,32], index: 1, kind: input, shape index: {}]
  %s2 = inlined_call_operand.vmem [shape: f32[1,32], index: 2, kind: input, shape index: {}]
  %s3 = inlined_call_operand.vmem [shape: f32[256,32], index: 3, kind: output, shape index: {}]
  %s4 = sld [smem:[#allocation0]]
  $region45: #{tpu_custom_call.1} parent=0
    _
  %s6 = ssub.s32 1, %s4
  %s7 = scalar_select 0, %s6, %s4
  loop: start=0, step=1, limit=4
  $region2: #{tpu_custom_call.1} parent=0 // loop_pre_header
    _
  $region3: #{tpu_custom_call.1} parent=0 // loop_header
    %s9 = sphi 0, %s13
    %p10 = scmp.ge.s32.totalorder %s9, 4
    %s19 = sphi 0, %s21
    %s22 = sphi 0, %s19
    %s23 = sphi 0, %s22
    %s39 = sphi 0, %s23
    %s43 = sphi 0, %s43
    %s45 = sphi 0, %s43
    %s46 = sphi 0, %s45
    %s60 = sphi 0, %s46
    %s64 = sphi 0, %s64
    %s66 = sphi 0, %s64
    %s67 = sphi 0, %s66
    %s81 = sphi 0, %s67
    %s87 = sphi 0, %s89
    %s90 = sphi 0, %s87
    %s91 = sphi 0, %s90
    %s107 = sphi 0, %s91
  $region4: #{tpu_custom_call.1} parent=0 // loop_header_branch
    %12 = sbr.rel (%p10) target = $region8
  $region5: #{tpu_custom_call.1} parent=0 // loop_body
    %s14 = ssub.s32 %s9, 1
    %s15 = ssub.s32 %s9, 2
    %s16 = sadd.s32 %s9, 1
    %s17 = ssub.s32 %s9, %s16
    %p18 = scmp.eq.s32.totalorder %s17, 0
    %s20 = sadd.s32 %s19, 1
    %s21 = scalar_select %p18, %s19, %s20
    %p24 = pneg %p18
    %p25 = scmp.eq.s32.totalorder %s9, 1
    %p26 = por %p24, %p25
    %p27 = scmp.ne.s32.totalorder %s19, %s22
    %p28 = scmp.eq.s32.totalorder %s9, 0
    %p29 = por %p27, %p28
    %p30 = scmp.ne.s32.totalorder %s19, %s22
    %p31 = scmp.eq.s32.totalorder %s14, 1
    %p32 = por %p30, %p31
    %p33 = scmp.ne.s32.totalorder %s22, %s23
    %p34 = scmp.eq.s32.totalorder %s14, 0
    %p35 = por %p33, %p34
    %p36 = scmp.ne.s32.totalorder %s22, %s23
    %p37 = scmp.eq.s32.totalorder %s15, 1
    %p38 = por %p36, %p37
    %p40 = scmp.ne.s32.totalorder %s23, %s39
    %p41 = scmp.eq.s32.totalorder %s15, 0
    %p42 = por %p40, %p41
    %s44 = sadd.s32 %s43, 1
    %p47 = scmp.eq.s32.totalorder %s9, 1
    %p48 = scmp.ne.s32.totalorder %s43, %s45
    %p49 = scmp.eq.s32.totalorder %s9, 0
    %p50 = por %p48, %p49
    %p51 = scmp.ne.s32.totalorder %s43, %s45
    %p52 = scmp.eq.s32.totalorder %s14, 1
    %p53 = por %p51, %p52
    %p54 = scmp.ne.s32.totalorder %s45, %s46
    %p55 = scmp.eq.s32.totalorder %s14, 0
    %p56 = por %p54, %p55
    %p57 = scmp.ne.s32.totalorder %s45, %s46
    %p58 = scmp.eq.s32.totalorder %s15, 1
    %p59 = por %p57, %p58
    %p61 = scmp.ne.s32.totalorder %s46, %s60
    %p62 = scmp.eq.s32.totalorder %s15, 0
    %p63 = por %p61, %p62
    %s65 = sadd.s32 %s64, 1
    %p68 = scmp.eq.s32.totalorder %s9, 1
    %p69 = scmp.ne.s32.totalorder %s64, %s66
    %p70 = scmp.eq.s32.totalorder %s9, 0
    %p71 = por %p69, %p70
    %p72 = scmp.ne.s32.totalorder %s64, %s66
    %p73 = scmp.eq.s32.totalorder %s14, 1
    %p74 = por %p72, %p73
    %p75 = scmp.ne.s32.totalorder %s66, %s67
    %p76 = scmp.eq.s32.totalorder %s14, 0
    %p77 = por %p75, %p76
    %p78 = scmp.ne.s32.totalorder %s66, %s67
    %p79 = scmp.eq.s32.totalorder %s15, 1
    %p80 = por %p78, %p79
    %p82 = scmp.ne.s32.totalorder %s67, %s81
    %p83 = scmp.eq.s32.totalorder %s15, 0
    %p84 = por %p82, %p83
    %s85 = ssub.s32 %s9, %s16
    %p86 = scmp.eq.s32.totalorder %s85, 0
    %s88 = sadd.s32 %s87, 1
    %s89 = scalar_select %p86, %s87, %s88
    %p92 = pneg %p86
    %p93 = scmp.eq.s32.totalorder %s9, 1
    %p94 = por %p92, %p93
    %p95 = scmp.ne.s32.totalorder %s87, %s90
    %p96 = scmp.eq.s32.totalorder %s9, 0
    %p97 = por %p95, %p96
    %p98 = scmp.ne.s32.totalorder %s87, %s90
    %p99 = scmp.eq.s32.totalorder %s14, 1
    %p100 = por %p98, %p99
    %p101 = scmp.ne.s32.totalorder %s90, %s91
    %p102 = scmp.eq.s32.totalorder %s14, 0
    %p103 = por %p101, %p102
    %p104 = scmp.ne.s32.totalorder %s90, %s91
    %p105 = scmp.eq.s32.totalorder %s15, 1
    %p106 = por %p104, %p105
    %p108 = scmp.ne.s32.totalorder %s91, %s107
    %p109 = scmp.eq.s32.totalorder %s15, 0
    %p110 = por %p108, %p109
    %p111 = scmp.le.s32.totalorder 1, %s9
    %p112 = scmp.lt.s32.totalorder %s9, 3
    %p113 = pnand %p111, %p112
    %p114 = pneg %p113
    // Predicated region
    $region9: #{tpu_custom_call.1} parent=5 // pred_check
      _
    $region10: #{tpu_custom_call.1} parent=5 // pred_check_branch
      %116 = sbr.rel (%p113) target = $region12
    $region11: #{tpu_custom_call.1} parent=5 // pred_region
      %s117 = ssub.s32 %s9, 1
      // Predicated region
      $region13: #{tpu_custom_call.1} parent=11 // pred_check
        %p118 = pneg %p56
      $region14: #{tpu_custom_call.1} parent=11 // pred_check_branch
        %120 = sbr.rel (%p118) target = $region16
      $region15: #{tpu_custom_call.1} parent=11 // pred_region
        _
      $region16: #{tpu_custom_call.1} parent=11 // pred_fallthru
        _
      // Predicated region
      $region17: #{tpu_custom_call.1} parent=11 // pred_check
        %p121 = pneg %p77
      $region18: #{tpu_custom_call.1} parent=11 // pred_check_branch
        %123 = sbr.rel (%p121) target = $region20
      $region19: #{tpu_custom_call.1} parent=11 // pred_region
        _
      $region20: #{tpu_custom_call.1} parent=11 // pred_fallthru
        _
    $region12: #{tpu_custom_call.1} parent=5 // pred_fallthru
      _
    %p124 = scmp.lt.s32.totalorder %s9, 2
    // Predicated region
    $region21: #{tpu_custom_call.1} parent=5 // pred_check
      %p125 = pneg %p124
    $region22: #{tpu_custom_call.1} parent=5 // pred_check_branch
      %127 = sbr.rel (%p125) target = $region24
    $region23: #{tpu_custom_call.1} parent=5 // pred_region
      // Predicated region
      $region25: #{tpu_custom_call.1} parent=23 // pred_check
        %p128 = pneg %p29
      $region26: #{tpu_custom_call.1} parent=23 // pred_check_branch
        %130 = sbr.rel (%p128) target = $region28
      $region27: #{tpu_custom_call.1} parent=23 // pred_region
        %s131 = smul.u32 16, %s9
        %p132 = scmp.lt.s32.totalorder %s131, 31
        %s133 = scalar_select %p132, %s131, 31
        %s134 = smul.addr %s133, 8
        %s135 = scalar_lea.vmem %s0, %s134
        %s136 = smul.u32 16, %s9
      $region28: #{tpu_custom_call.1} parent=23 // pred_fallthru
        _
    $region24: #{tpu_custom_call.1} parent=5 // pred_fallthru
      _
    %p137 = scmp.le.s32.totalorder 1, %s9
    %p138 = scmp.lt.s32.totalorder %s9, 3
    %p139 = pnand %p137, %p138
    %p140 = pneg %p139
    // Predicated region
    $region29: #{tpu_custom_call.1} parent=5 // pred_check
      _
    $region30: #{tpu_custom_call.1} parent=5 // pred_check_branch
      %142 = sbr.rel (%p139) target = $region32
    $region31: #{tpu_custom_call.1} parent=5 // pred_region
      %s143 = ssub.s32 %s9, 1
      %s144 = smul.u32 16, %s14
      %p145 = scmp.lt.s32.totalorder %s144, 31
      %s146 = scalar_select %p145, %s144, 31
      %s147 = smul.addr %s146, 8
      %s148 = scalar_lea.vmem %s0, %s147
      %p149 = pneg %p35
      %p150 = pneg %p32
      %p151 = pneg %p56
      %p152 = pneg %p53
      %p153 = pneg %p77
      %p154 = pneg %p74
      %p155 = pneg %p103
      %p156 = pneg %p100
      %s157 = smul.u32 16, %s14
      %p158 = scmp.lt.s32.totalorder %s157, 31
      %s159 = scalar_select %p158, %s157, 31
      %s160 = smul.addr %s159, 8
      %s161 = scalar_lea.vmem %s3, %s160
      %s162 = smul.u32 16, %s14
      %p163 = scmp.lt.s32.totalorder %s162, 31
      %s164 = scalar_select %p163, %s162, 31
      %s165 = smul.addr %s164, 8
      %s166 = scalar_lea.vmem %s0, %s165
      %s167 = smul.u32 16, %s14
      %s168 = smul.u32 16, %s14
      %p169 = scmp.lt.s32.totalorder %s168, 31
      %s170 = scalar_select %p169, %s168, 31
      %s171 = smul.addr %s170, 8
      %s172 = scalar_lea.vmem %s3, %s171
      %s173 = smul.u32 16, %s14
      %v174 = vld [vmem:[%s166] sm:$0xff]
      %v175 = vld [vmem:[%s166 + $0x8] sm:$0xff]
      %v176 = vld [vmem:[%s166 + $0x10] sm:$0xff]
      %v177 = vld [vmem:[%s166 + $0x18] sm:$0xff]
      %v178 = vld [vmem:[%s166 + $0x20] sm:$0xff]
      %v179 = vld [vmem:[%s166 + $0x28] sm:$0xff]
      %v180 = vld [vmem:[%s166 + $0x30] sm:$0xff]
      %v181 = vld [vmem:[%s166 + $0x38] sm:$0xff]
      %v182 = vld [vmem:[%s166 + $0x40] sm:$0xff]
      %v183 = vld [vmem:[%s166 + $0x48] sm:$0xff]
      %v184 = vld [vmem:[%s166 + $0x50] sm:$0xff]
      %v185 = vld [vmem:[%s166 + $0x58] sm:$0xff]
      %v186 = vld [vmem:[%s166 + $0x60] sm:$0xff]
      %v187 = vld [vmem:[%s166 + $0x68] sm:$0xff]
      %v188 = vld [vmem:[%s166 + $0x70] sm:$0xff]
      %v189 = vld [vmem:[%s166 + $0x78] sm:$0xff]
      %v190 = vld [vmem:[%s1] sm:$0xff]
      %v191 = vld [vmem:[%s1 + $0x8] sm:$0xff]
      %v192 = vld [vmem:[%s1 + $0x10] sm:$0xff]
      %v193 = vld [vmem:[%s1 + $0x18] sm:$0xff]
      %v194 = vld [vmem:[%s2] sm:$0x1]
      %v196 = vlaneseq
      %v197 = vshrl.u32 %v196, 7
      %v198 = vsub.s32 0, %v197
      %v199 = vrot.slane %v194, %v198
      %vm201 = vcmask 261120
      %v203 = vsel %vm201, %v174, 0
      %v206 = vsel %vm201, %v175, 0
      %v209 = vsel %vm201, %v176, 0
      %v212 = vsel %vm201, %v177, 0
      %v215 = vsel %vm201, %v178, 0
      %v218 = vsel %vm201, %v179, 0
      %v221 = vsel %vm201, %v180, 0
      %v224 = vsel %vm201, %v181, 0
      %v227 = vsel %vm201, %v182, 0
      %v230 = vsel %vm201, %v183, 0
      %v233 = vsel %vm201, %v184, 0
      %v236 = vsel %vm201, %v185, 0
      %v239 = vsel %vm201, %v186, 0
      %v242 = vsel %vm201, %v187, 0
      %v245 = vsel %vm201, %v188, 0
      %v248 = vsel %vm201, %v189, 0
      %250 = vmatprep.subr.mxu0 0.0
      %251 = vmatpush1.msra.mxu0 %v190
      %252 = vmatprep.subr.mxu0 0.0
      %253 = vmatpush1.msra.mxu0 %v191
      %254 = vmatprep.subr.mxu0 0.0
      %255 = vmatpush1.msra.mxu0 %v192
      %256 = vmatprep.subr.mxu0 0.0
      %257 = vmatpush1.msra.mxu0 %v193
      %258 = vmatprep.subr.mxu0 0.0
      %259 = vmatpush1.msra.mxu0 0.0
      %260 = vmatprep.subr.mxu0 0.0
      %261 = vmatpush1.msra.mxu0 0.0
      %262 = vmatprep.subr.mxu0 0.0
      %263 = vmatpush1.msra.mxu0 0.0
      %264 = vmatprep.subr.mxu0 0.0
      %265 = vmatpush1.msra.mxu0 0.0
      %266 = vmatprep.subr.mxu0 0.0
      %267 = vmatpush1.msra.mxu0 0.0
      %268 = vmatprep.subr.mxu0 0.0
      %269 = vmatpush1.msra.mxu0 0.0
      %270 = vmatprep.subr.mxu0 0.0
      %271 = vmatpush1.msra.mxu0 0.0
      %272 = vmatprep.subr.mxu0 0.0
      %273 = vmatpush1.msra.mxu0 0.0
      %274 = vmatprep.subr.mxu0 0.0
      %275 = vmatpush1.msra.mxu0 0.0
      %276 = vmatprep.subr.mxu0 0.0
      %277 = vmatpush1.msra.mxu0 0.0
      %278 = vmatprep.subr.mxu0 0.0
      %279 = vmatpush1.msra.mxu0 0.0
      %280 = vmatprep.subr.mxu0 0.0
      %281 = vmatpush1.msra.mxu0 0.0
      %282 = vmatprep.subr.mxu0 0.0
      %283 = vmatpush1.msra.mxu0 0.0
      %284 = vmatprep.subr.mxu0 0.0
      %285 = vmatpush1.msra.mxu0 0.0
      %286 = vmatprep.subr.mxu0 0.0
      %287 = vmatpush1.msra.mxu0 0.0
      %288 = vmatprep.subr.mxu0 0.0
      %289 = vmatpush1.msra.mxu0 0.0
      %290 = vmatprep.subr.mxu0 0.0
      %291 = vmatpush1.msra.mxu0 0.0
      %292 = vmatprep.subr.mxu0 0.0
      %293 = vmatpush1.msra.mxu0 0.0
      %294 = vmatprep.subr.mxu0 0.0
      %295 = vmatpush1.msra.mxu0 0.0
      %296 = vmatprep.subr.mxu0 0.0
      %297 = vmatpush1.msra.mxu0 0.0
      %298 = vmatprep.subr.mxu0 0.0
      %299 = vmatpush1.msra.mxu0 0.0
      %300 = vmatprep.subr.mxu0 0.0
      %301 = vmatpush1.msra.mxu0 0.0
      %302 = vmatprep.subr.mxu0 0.0
      %303 = vmatpush1.msra.mxu0 0.0
      %304 = vmatprep.subr.mxu0 0.0
      %305 = vmatpush1.msra.mxu0 0.0
      %306 = vmatprep.subr.mxu0 0.0
      %307 = vmatpush1.msra.mxu0 0.0
      %308 = vmatprep.subr.mxu0 0.0
      %309 = vmatpush1.msra.mxu0 0.0
      %310 = vmatprep.subr.mxu0 0.0
      %311 = vmatpush1.msra.mxu0 0.0
      %312 = vmatprep.subr.mxu0 0.0
      %313 = vmatpush1.msra.mxu0 0.0
      %314 = vmatprep.mubr.f32.mxu0 0.0
      %315 = vmatmul.mubr.f32.gmra.mrb[0].mxu0 %v203
      %v316 = vpop.f32.mrb[0].mxu0
      %v317 = vadd.f32 %v199, %v316
      %v318 = vpop.f32.mrb[0].mxu0
      %319 = vmatprep.mubr.f32.mxu0 0.0
      %320 = vmatmul.mubr.f32.gmra.mrb[0].mxu0 %v206
      %v321 = vpop.f32.mrb[0].mxu0
      %v322 = vadd.f32 %v199, %v321
      %v323 = vpop.f32.mrb[0].mxu0
      %324 = vmatprep.mubr.f32.mxu0 0.0
      %325 = vmatmul.mubr.f32.gmra.mrb[0].mxu0 %v209
      %v326 = vpop.f32.mrb[0].mxu0
      %v327 = vadd.f32 %v199, %v326
      %v328 = vpop.f32.mrb[0].mxu0
      %329 = vmatprep.mubr.f32.mxu0 0.0
      %330 = vmatmul.mubr.f32.gmra.mrb[0].mxu0 %v212
      %v331 = vpop.f32.mrb[0].mxu0
      %v332 = vadd.f32 %v199, %v331
      %v333 = vpop.f32.mrb[0].mxu0
      %334 = vmatprep.mubr.f32.mxu0 0.0
      %335 = vmatmul.mubr.f32.gmra.mrb[0].mxu0 %v215
      %v336 = vpop.f32.mrb[0].mxu0
      %v337 = vadd.f32 %v199, %v336
      %v338 = vpop.f32.mrb[0].mxu0
      %339 = vmatprep.mubr.f32.mxu0 0.0
      %340 = vmatmul.mubr.f32.gmra.mrb[0].mxu0 %v218
      %v341 = vpop.f32.mrb[0].mxu0
      %v342 = vadd.f32 %v199, %v341
      %v343 = vpop.f32.mrb[0].mxu0
      %344 = vmatprep.mubr.f32.mxu0 0.0
      %345 = vmatmul.mubr.f32.gmra.mrb[0].mxu0 %v221
      %v346 = vpop.f32.mrb[0].mxu0
      %v347 = vadd.f32 %v199, %v346
      %v348 = vpop.f32.mrb[0].mxu0
      %349 = vmatprep.mubr.f32.mxu0 0.0
      %350 = vmatmul.mubr.f32.gmra.mrb[0].mxu0 %v224
      %v351 = vpop.f32.mrb[0].mxu0
      %v352 = vadd.f32 %v199, %v351
      %v353 = vpop.f32.mrb[0].mxu0
      %354 = vmatprep.mubr.f32.mxu0 0.0
      %355 = vmatmul.mubr.f32.gmra.mrb[0].mxu0 %v227
      %v356 = vpop.f32.mrb[0].mxu0
      %v357 = vadd.f32 %v199, %v356
      %v358 = vpop.f32.mrb[0].mxu0
      %359 = vmatprep.mubr.f32.mxu0 0.0
      %360 = vmatmul.mubr.f32.gmra.mrb[0].mxu0 %v230
      %v361 = vpop.f32.mrb[0].mxu0
      %v362 = vadd.f32 %v199, %v361
      %v363 = vpop.f32.mrb[0].mxu0
      %364 = vmatprep.mubr.f32.mxu0 0.0
      %365 = vmatmul.mubr.f32.gmra.mrb[0].mxu0 %v233
      %v366 = vpop.f32.mrb[0].mxu0
      %v367 = vadd.f32 %v199, %v366
      %v368 = vpop.f32.mrb[0].mxu0
      %369 = vmatprep.mubr.f32.mxu0 0.0
      %370 = vmatmul.mubr.f32.gmra.mrb[0].mxu0 %v236
      %v371 = vpop.f32.mrb[0].mxu0
      %v372 = vadd.f32 %v199, %v371
      %v373 = vpop.f32.mrb[0].mxu0
      %374 = vmatprep.mubr.f32.mxu0 0.0
      %375 = vmatmul.mubr.f32.gmra.mrb[0].mxu0 %v239
      %v376 = vpop.f32.mrb[0].mxu0
      %v377 = vadd.f32 %v199, %v376
      %v378 = vpop.f32.mrb[0].mxu0
      %379 = vmatprep.mubr.f32.mxu0 0.0
      %380 = vmatmul.mubr.f32.gmra.mrb[0].mxu0 %v242
      %v381 = vpop.f32.mrb[0].mxu0
      %v382 = vadd.f32 %v199, %v381
      %v383 = vpop.f32.mrb[0].mxu0
      %384 = vmatprep.mubr.f32.mxu0 0.0
      %385 = vmatmul.mubr.f32.gmra.mrb[0].mxu0 %v245
      %v386 = vpop.f32.mrb[0].mxu0
      %v387 = vadd.f32 %v199, %v386
      %v388 = vpop.f32.mrb[0].mxu0
      %389 = vmatprep.mubr.f32.mxu0 0.0
      %390 = vmatmul.mubr.f32.gmra.mrb[0].mxu0 %v248
      %v391 = vpop.f32.mrb[0].mxu0
      %v392 = vadd.f32 %v199, %v391
      %v393 = vpop.f32.mrb[0].mxu0
      %394 = vdwg.mxu0
      %v395 = vlaneseq
      %v396 = vand.u32 %v395, 127
      %vm397 = vcmp.ge.s32.totalorder %v396, 16
      %v398 = vmul.f32 %v317, %v317
      %v399 = vmul.f32 %v322, %v322
      %v400 = vmul.f32 %v327, %v327
      %v401 = vmul.f32 %v332, %v332
      %v402 = vmul.f32 %v337, %v337
      %v403 = vmul.f32 %v342, %v342
      %v404 = vmul.f32 %v347, %v347
      %v405 = vmul.f32 %v352, %v352
      %v406 = vmul.f32 %v357, %v357
      %v407 = vmul.f32 %v362, %v362
      %v408 = vmul.f32 %v367, %v367
      %v409 = vmul.f32 %v372, %v372
      %v410 = vmul.f32 %v377, %v377
      %v411 = vmul.f32 %v382, %v382
      %v412 = vmul.f32 %v387, %v387
      %v413 = vmul.f32 %v392, %v392
      %v414 = vsel %vm397, %v398, 0.0
      %v415 = vsel %vm397, %v399, 0.0
      %v416 = vsel %vm397, %v400, 0.0
      %v417 = vsel %vm397, %v401, 0.0
      %v418 = vsel %vm397, %v402, 0.0
      %v419 = vsel %vm397, %v403, 0.0
      %v420 = vsel %vm397, %v404, 0.0
      %v421 = vsel %vm397, %v405, 0.0
      %v422 = vsel %vm397, %v406, 0.0
      %v423 = vsel %vm397, %v407, 0.0
      %v424 = vsel %vm397, %v408, 0.0
      %v425 = vsel %vm397, %v409, 0.0
      %v426 = vsel %vm397, %v410, 0.0
      %v427 = vsel %vm397, %v411, 0.0
      %v428 = vsel %vm397, %v412, 0.0
      %v429 = vsel %vm397, %v413, 0.0
      %v430 = vsel %vm201, %v414, 0.0
      %431 = vadd.xlane.f32.xlu0 %v430
      %v432 = vpop.xlane.xlu0 %431
      %v433 = vsel %vm201, %v415, 0.0
      %434 = vadd.xlane.f32.xlu0 %v433
      %v435 = vpop.xlane.xlu0 %434
      %v436 = vsel %vm201, %v416, 0.0
      %437 = vadd.xlane.f32.xlu0 %v436
      %v438 = vpop.xlane.xlu0 %437
      %v439 = vsel %vm201, %v417, 0.0
      %440 = vadd.xlane.f32.xlu0 %v439
      %v441 = vpop.xlane.xlu0 %440
      %v442 = vsel %vm201, %v418, 0.0
      %443 = vadd.xlane.f32.xlu0 %v442
      %v444 = vpop.xlane.xlu0 %443
      %v445 = vsel %vm201, %v419, 0.0
      %446 = vadd.xlane.f32.xlu0 %v445
      %v447 = vpop.xlane.xlu0 %446
      %v448 = vsel %vm201, %v420, 0.0
      %449 = vadd.xlane.f32.xlu0 %v448
      %v450 = vpop.xlane.xlu0 %449
      %v451 = vsel %vm201, %v421, 0.0
      %452 = vadd.xlane.f32.xlu0 %v451
      %v453 = vpop.xlane.xlu0 %452
      %v454 = vsel %vm201, %v422, 0.0
      %455 = vadd.xlane.f32.xlu0 %v454
      %v456 = vpop.xlane.xlu0 %455
      %v457 = vsel %vm201, %v423, 0.0
      %458 = vadd.xlane.f32.xlu0 %v457
      %v459 = vpop.xlane.xlu0 %458
      %v460 = vsel %vm201, %v424, 0.0
      %461 = vadd.xlane.f32.xlu0 %v460
      %v462 = vpop.xlane.xlu0 %461
      %v463 = vsel %vm201, %v425, 0.0
      %464 = vadd.xlane.f32.xlu0 %v463
      %v465 = vpop.xlane.xlu0 %464
      %v466 = vsel %vm201, %v426, 0.0
      %467 = vadd.xlane.f32.xlu0 %v466
      %v468 = vpop.xlane.xlu0 %467
      %v469 = vsel %vm201, %v427, 0.0
      %470 = vadd.xlane.f32.xlu0 %v469
      %v471 = vpop.xlane.xlu0 %470
      %v472 = vsel %vm201, %v428, 0.0
      %473 = vadd.xlane.f32.xlu0 %v472
      %v474 = vpop.xlane.xlu0 %473
      %v475 = vsel %vm201, %v429, 0.0
      %476 = vadd.xlane.f32.xlu0 %v475
      %v477 = vpop.xlane.xlu0 %476
      %v478 = vmax.f32 %v432, 1e-24
      %v479 = vmax.f32 %v435, 1e-24
      %v480 = vmax.f32 %v438, 1e-24
      %v481 = vmax.f32 %v441, 1e-24
      %v482 = vmax.f32 %v444, 1e-24
      %v483 = vmax.f32 %v447, 1e-24
      %v484 = vmax.f32 %v450, 1e-24
      %v485 = vmax.f32 %v453, 1e-24
      %v486 = vmax.f32 %v456, 1e-24
      %v487 = vmax.f32 %v459, 1e-24
      %v488 = vmax.f32 %v462, 1e-24
      %v489 = vmax.f32 %v465, 1e-24
      %v490 = vmax.f32 %v468, 1e-24
      %v491 = vmax.f32 %v471, 1e-24
      %v492 = vmax.f32 %v474, 1e-24
      %v493 = vmax.f32 %v477, 1e-24
      %v494 = vrsqrt.pop %v478
      %v495 = vrsqrt.pop %v479
      %v496 = vrsqrt.pop %v480
      %v497 = vrsqrt.pop %v481
      %v498 = vrsqrt.pop %v482
      %v499 = vrsqrt.pop %v483
      %v500 = vrsqrt.pop %v484
      %v501 = vrsqrt.pop %v485
      %v502 = vrsqrt.pop %v486
      %v503 = vrsqrt.pop %v487
      %v504 = vrsqrt.pop %v488
      %v505 = vrsqrt.pop %v489
      %v506 = vrsqrt.pop %v490
      %v507 = vrsqrt.pop %v491
      %v508 = vrsqrt.pop %v492
      %v509 = vrsqrt.pop %v493
      %v510 = vmul.f32 %v494, 1.8
      %v511 = vmul.f32 %v495, 1.8
      %v512 = vmul.f32 %v496, 1.8
      %v513 = vmul.f32 %v497, 1.8
      %v514 = vmul.f32 %v498, 1.8
      %v515 = vmul.f32 %v499, 1.8
      %v516 = vmul.f32 %v500, 1.8
      %v517 = vmul.f32 %v501, 1.8
      %v518 = vmul.f32 %v502, 1.8
      %v519 = vmul.f32 %v503, 1.8
      %v520 = vmul.f32 %v504, 1.8
      %v521 = vmul.f32 %v505, 1.8
      %v522 = vmul.f32 %v506, 1.8
      %v523 = vmul.f32 %v507, 1.8
      %v524 = vmul.f32 %v508, 1.8
      %v525 = vmul.f32 %v509, 1.8
      %v526 = vsel %vm397, %v510, 1.0
      %v527 = vsel %vm397, %v511, 1.0
      %v528 = vsel %vm397, %v512, 1.0
      %v529 = vsel %vm397, %v513, 1.0
      %v530 = vsel %vm397, %v514, 1.0
      %v531 = vsel %vm397, %v515, 1.0
      %v532 = vsel %vm397, %v516, 1.0
      %v533 = vsel %vm397, %v517, 1.0
      %v534 = vsel %vm397, %v518, 1.0
      %v535 = vsel %vm397, %v519, 1.0
      %v536 = vsel %vm397, %v520, 1.0
      %v537 = vsel %vm397, %v521, 1.0
      %v538 = vsel %vm397, %v522, 1.0
      %v539 = vsel %vm397, %v523, 1.0
      %v540 = vsel %vm397, %v524, 1.0
      %v541 = vsel %vm397, %v525, 1.0
      %v542 = vmul.f32 %v317, %v526
      %v543 = vmul.f32 %v322, %v527
      %v544 = vmul.f32 %v327, %v528
      %v545 = vmul.f32 %v332, %v529
      %v546 = vmul.f32 %v337, %v530
      %v547 = vmul.f32 %v342, %v531
      %v548 = vmul.f32 %v347, %v532
      %v549 = vmul.f32 %v352, %v533
      %v550 = vmul.f32 %v357, %v534
      %v551 = vmul.f32 %v362, %v535
      %v552 = vmul.f32 %v367, %v536
      %v553 = vmul.f32 %v372, %v537
      %v554 = vmul.f32 %v377, %v538
      %v555 = vmul.f32 %v382, %v539
      %v556 = vmul.f32 %v387, %v540
      %v557 = vmul.f32 %v392, %v541
      %558 = vst.msk [vmem:[%s172] sm:$0xff] %vm201, %v542
      %559 = vst.msk [vmem:[%s172 + $0x8] sm:$0xff] %vm201, %v543
      %560 = vst.msk [vmem:[%s172 + $0x10] sm:$0xff] %vm201, %v544
      %561 = vst.msk [vmem:[%s172 + $0x18] sm:$0xff] %vm201, %v545
      %562 = vst.msk [vmem:[%s172 + $0x20] sm:$0xff] %vm201, %v546
      %563 = vst.msk [vmem:[%s172 + $0x28] sm:$0xff] %vm201, %v547
      %564 = vst.msk [vmem:[%s172 + $0x30] sm:$0xff] %vm201, %v548
      %565 = vst.msk [vmem:[%s172 + $0x38] sm:$0xff] %vm201, %v549
      %566 = vst.msk [vmem:[%s172 + $0x40] sm:$0xff] %vm201, %v550
      %567 = vst.msk [vmem:[%s172 + $0x48] sm:$0xff] %vm201, %v551
      %568 = vst.msk [vmem:[%s172 + $0x50] sm:$0xff] %vm201, %v552
      %569 = vst.msk [vmem:[%s172 + $0x58] sm:$0xff] %vm201, %v553
      %570 = vst.msk [vmem:[%s172 + $0x60] sm:$0xff] %vm201, %v554
      %571 = vst.msk [vmem:[%s172 + $0x68] sm:$0xff] %vm201, %v555
      %572 = vst.msk [vmem:[%s172 + $0x70] sm:$0xff] %vm201, %v556
      %573 = vst.msk [vmem:[%s172 + $0x78] sm:$0xff] %vm201, %v557
      %s574 = smul.u32 16, %s14
      %p575 = scmp.lt.s32.totalorder %s574, 31
      %s576 = scalar_select %p575, %s574, 31
      %s577 = smul.addr %s576, 8
      %s578 = scalar_lea.vmem %s3, %s577
      // Predicated region
      $region33: #{tpu_custom_call.1} parent=31 // pred_check
        %p579 = pneg %p100
      $region34: #{tpu_custom_call.1} parent=31 // pred_check_branch
        %581 = sbr.rel (%p579) target = $region36
      $region35: #{tpu_custom_call.1} parent=31 // pred_region
        %s582 = smul.u32 16, %s14
      $region36: #{tpu_custom_call.1} parent=31 // pred_fallthru
        _
    $region32: #{tpu_custom_call.1} parent=5 // pred_fallthru
      _
    %p583 = scmp.le.s32.totalorder 2, %s9
    // Predicated region
    $region37: #{tpu_custom_call.1} parent=5 // pred_check
      %p584 = pneg %p583
    $region38: #{tpu_custom_call.1} parent=5 // pred_check_branch
      %586 = sbr.rel (%p584) target = $region40
    $region39: #{tpu_custom_call.1} parent=5 // pred_region
      %s587 = ssub.s32 %s9, 2
      // Predicated region
      $region41: #{tpu_custom_call.1} parent=39 // pred_check
        %p588 = pneg %p106
      $region42: #{tpu_custom_call.1} parent=39 // pred_check_branch
        %590 = sbr.rel (%p588) target = $region44
      $region43: #{tpu_custom_call.1} parent=39 // pred_region
        %s591 = smul.u32 16, %s15
        %p592 = scmp.lt.s32.totalorder %s591, 31
        %s593 = scalar_select %p592, %s591, 31
        %s594 = smul.addr %s593, 8
        %s595 = scalar_lea.vmem %s3, %s594
      $region44: #{tpu_custom_call.1} parent=39 // pred_fallthru
        _
    $region40: #{tpu_custom_call.1} parent=5 // pred_fallthru
      _
  $region6: #{tpu_custom_call.1} parent=0 // loop_footer
    %s13 = sadd.s32 1, %s9
  $region7: #{tpu_custom_call.1} parent=0 // loop_footer_branch
    %8 = sbr.rel target = $region3
  $region8: #{tpu_custom_call.1} parent=0 // loop_exit
    _

</llo_original>
